<compile_context>
chip_gen: v7x
topology: tpu7x:2x2x1
jax: 0.10.0
libtpu: 0.0.40
codegen_flags: <defaults>
</compile_context>

<pallas_src>
import functools

import jax
import jax.numpy as jnp
from jax import lax
from jax.experimental import pallas as pl
from jax.experimental.pallas import tpu as pltpu


def _efloss2d_kernel(x1_ref, x2_ref, out_ref, *, nc, b_tile, use_roll):
    """One grid step: |Sobel| partial sums over a (b_tile, H, W) slab."""
    H = x1_ref.shape[1]
    W = x1_ref.shape[2]

    # Conv is linear -> Sobel the difference once.
    d = x1_ref[...].astype(jnp.float32) - x2_ref[...].astype(jnp.float32)

    # Ragged last block: zero images whose global index is >= nc.
    # (Statically skipped when b_tile divides nc; full blocks pay nothing.)
    if nc % b_tile != 0:
        base = pl.program_id(0) * b_tile
        bidx = lax.broadcasted_iota(jnp.int32, d.shape, 0)
        d = jnp.where(base + bidx < nc, d, 0.0)

    # Separable Sobel (cross-correlation, matching torch F.conv2d, no flip):
    #   filtx = [1,2,1]^T (rows) (x) [1,0,-1] (cols)
    #   filty = [1,0,-1]^T (rows) (x) [1,2,1]  (cols)
    if use_roll:
        # Aligned shapes: XLU rolls instead of tile-boundary-crossing slices;
        # wrapped boundary rows/cols are masked before the reduction.
        mid = pltpu.roll(d, shift=H - 1, axis=1)   # row i <- row i+1 (mod H)
        bot = pltpu.roll(d, shift=H - 2, axis=1)   # row i <- row i+2 (mod H)
        a = d + 2.0 * mid + bot                    # vertical smoothing  (gx)
        b = d - bot                                # vertical derivative (gy)
        gx = a - pltpu.roll(a, shift=W - 2, axis=2)
        gy = (b + 2.0 * pltpu.roll(b, shift=W - 1, axis=2)
              + pltpu.roll(b, shift=W - 2, axis=2))
        contrib = jnp.abs(gx) + jnp.abs(gy)        # (b_tile, H, W)
        rows = lax.broadcasted_iota(jnp.int32, contrib.shape, 1)
        cols = lax.broadcasted_iota(jnp.int32, contrib.shape, 2)
        valid = (rows < H - 2) & (cols < W - 2)
        contrib = jnp.where(valid, contrib, 0.0)
    else:
        top = d[:, 0:H - 2, :]
        mid = d[:, 1:H - 1, :]
        bot = d[:, 2:H, :]
        a = top + 2.0 * mid + bot                  # vertical smoothing  (gx)
        b = top - bot                              # vertical derivative (gy)
        gx = a[:, :, 0:W - 2] - a[:, :, 2:W]
        gy = b[:, :, 0:W - 2] + 2.0 * b[:, :, 1:W - 1] + b[:, :, 2:W]
        contrib = jnp.abs(gx) + jnp.abs(gy)        # (b_tile, H-2, W-2)

    # Per-block lane-column partial: batch reduce (plain VPU adds) and row
    # reduce (sublane) only -- no full cross-lane reduction tree, one store.
    tmp = jnp.sum(contrib, axis=0, keepdims=True)
    out_ref[...] = jnp.sum(tmp, axis=1, keepdims=True)


def _physical_vmem_bytes():
    try:
        info = pltpu.get_tpu_info()
        cap = getattr(info, "vmem_capacity_bytes", None)
        if cap:
            return int(cap)
    except Exception:
        pass
    return 64 << 20   # conservative fallback (v7x per-core size), safe everywhere


def _pick_b_tile(nc, budget):
    """Largest batch tile <= budget; prefer an exact divisor of nc near the
    budget so the ragged-block mask can be skipped entirely."""
    budget = int(max(1, min(nc, budget)))
    lower = max((budget + 1) // 2, 1)
    for cand in range(budget, lower - 1, -1):
        if nc % cand == 0:
            return cand
    return budget


def ef_loss(im1, im2):
    """Pallas implementation of EFLoss.forward (2D path, and 5D with depth 1)."""
    if im1.shape != im2.shape:
        raise Exception('Input shapes do not match!!')
    if im1.ndim == 5:
        if im1.shape[2] == 1:
            im1 = jnp.squeeze(im1, axis=2)
            im2 = jnp.squeeze(im2, axis=2)
        else:
            # TODO(synk): loss3d (3x3x3 volumetric Sobel) path not implemented.
            raise NotImplementedError('loss3d path not implemented')
    if im1.ndim != 4:
        raise Exception('Unsupported number of dimensions!!')

    N, C, H, W = im1.shape
    assert C == 1, 'reference conv2d uses a (1,1,3,3) weight -> C must be 1'
    assert H >= 3 and W >= 3, 'valid 3x3 conv needs H,W >= 3'

    nc = N * C
    # Free (contiguous) reshape; native dtype stays in HBM, cast in-kernel.
    x1 = im1.reshape(nc, H, W)
    x2 = im2.reshape(nc, H, W)
    # TODO(synk): for W << 128 lane utilization is only W/128; packing k images
    # side-by-side along the last axis (k*W multiple of 128, masking the 2 seam
    # columns per junction in-kernel) restores full vregs, but the wrapper-side
    # transpose is itself a full HBM copy, so it only pays off when the kernel
    # is VPU/ld-st bound rather than HBM bound -- left to the caller to pre-pack.

    # ---- generation-aware block sizing -------------------------------------
    itemsize = jnp.dtype(im1.dtype).itemsize
    native_img = H * W * itemsize          # per-image DMA bytes (per input)
    f32_img = H * W * 4                    # per-image f32 compute footprint
    # 2 inputs x 2 pipeline buffers (native dtype) + ~6 f32 intermediates.
    per_img_vmem = 4 * native_img + 6 * f32_img

    vmem_phys = _physical_vmem_bytes()
    # ~25% headroom below physical VMEM: ~96 MiB on v5e/v6e, ~48 MiB on v7x.
    vmem_cap = min((vmem_phys * 3) // 4, 100 << 20)

    b_budget = max(1, (vmem_cap - (2 << 20)) // per_img_vmem)
    if nc >= 2:
        # Keep >= 2 grid steps so the "parallel" axis can shard over both
        # TensorCores on v7x.
        b_budget = min(b_budget, (nc + 1) // 2)
    b_tile = _pick_b_tile(nc, b_budget)
    n_blocks = -(-nc // b_tile)  # cdiv

    needed = b_tile * per_img_vmem + (1 << 20)
    vmem_limit = int(min(vmem_cap, max(needed + (4 << 20), 32 << 20)))
    # TODO(synk): for a single very large image (>= ~4 MiB f32 on v7x) add
    # H-tiling with a 2-row halo instead of whole-image blocks.
    # TODO(synk): once blocks are large, sweep pipeline_mode=pl.Buffered(3) on
    # the two input BlockSpecs (extra buffers must still fit under vmem_cap).

    use_roll = (W % 128 == 0) and (H % 8 == 0)
    out_w = W if use_roll else W - 2

    kernel = functools.partial(_efloss2d_kernel, nc=nc, b_tile=b_tile,
                               use_roll=use_roll)
    partials = pl.pallas_call(
        kernel,
        out_shape=jax.ShapeDtypeStruct((n_blocks, 1, out_w), jnp.float32),
        grid=(n_blocks,),
        in_specs=[
            pl.BlockSpec((b_tile, H, W), lambda i: (i, 0, 0)),
            pl.BlockSpec((b_tile, H, W), lambda i: (i, 0, 0)),
        ],
        out_specs=pl.BlockSpec((1, 1, out_w), lambda i: (i, 0, 0)),
        compiler_params=pltpu.CompilerParams(
            dimension_semantics=("parallel",),
            vmem_limit_bytes=vmem_limit),
    )(x1, x2)

    count = nc * (H - 2) * (W - 2)
    return jnp.sum(partials) / jnp.float32(count)


def _ref_loss(im1, im2):
    """Pure-JAX reference using lax convolution (mirrors the torch code)."""
    filtx = jnp.array([[1, 0, -1], [2, 0, -2], [1, 0, -1]],
                      jnp.float32).reshape(1, 1, 3, 3)
    filty = jnp.array([[1, 2, 1], [0, 0, 0], [-1, -2, -1]],
                      jnp.float32).reshape(1, 1, 3, 3)
    dn = jax.lax.conv_dimension_numbers(im1.shape, filtx.shape,
                                        ('NCHW', 'OIHW', 'NCHW'))

    def conv(x, w):
        return jax.lax.conv_general_dilated(x, w, (1, 1), 'VALID',
                                            dimension_numbers=dn)

    gx1, gy1 = conv(im1, filtx), conv(im1, filty)
    gx2, gy2 = conv(im2, filtx), conv(im2, filty)
    return jnp.mean(jnp.abs(gx1 - gx2) + jnp.abs(gy1 - gy2))


if __name__ == "__main__":
    key = jax.random.PRNGKey(0)
    k1, k2, k3, k4, k5, k6 = jax.random.split(key, 6)

    # 4D (NCHW) path, C must be 1 for the (1,1,3,3) reference conv.
    im1 = jax.random.normal(k1, (2, 1, 16, 16), dtype=jnp.float32)
    im2 = jax.random.normal(k2, (2, 1, 16, 16), dtype=jnp.float32)
    loss = ef_loss(im1, im2)
    jax.block_until_ready(loss)
    ref = _ref_loss(im1, im2)
    assert jnp.allclose(loss, ref, rtol=1e-5, atol=1e-5), (loss, ref)

    # 5D path with depth 1 (squeeze branch of forward).
    v1 = jax.random.normal(k3, (2, 1, 1, 16, 16), dtype=jnp.float32)
    v2 = jax.random.normal(k4, (2, 1, 1, 16, 16), dtype=jnp.float32)
    loss5 = ef_loss(v1, v2)
    jax.block_until_ready(loss5)
    ref5 = _ref_loss(jnp.squeeze(v1, 2), jnp.squeeze(v2, 2))
    assert jnp.allclose(loss5, ref5, rtol=1e-5, atol=1e-5), (loss5, ref5)

    # Ragged batch (nc not a multiple of the block batch): exercises the
    # in-kernel batch mask that replaced the HBM zero-padding copy.
    r1 = jax.random.normal(k5, (5, 1, 16, 16), dtype=jnp.float32)
    r2 = jax.random.normal(k6, (5, 1, 16, 16), dtype=jnp.float32)
    loss_r = ef_loss(r1, r2)
    jax.block_until_ready(loss_r)
    ref_r = _ref_loss(r1, r2)
    assert jnp.allclose(loss_r, ref_r, rtol=1e-5, atol=1e-5), (loss_r, ref_r)

    print("KERNEL_OK")
</pallas_src>

<mosaic_0001>
module attributes {stable_mosaic.version = 11 : i64} {
  func.func @_efloss2d_kernel(%arg0: i32, %arg1: memref<1x16x16xf32, #tpu.memory_space<vmem>>, %arg2: memref<1x16x16xf32, #tpu.memory_space<vmem>>, %arg3: memref<1x1x14xf32, #tpu.memory_space<vmem>>) attributes {dimension_semantics = [#tpu.dimension_semantics<parallel>], iteration_bounds = array<i64: 2>, scalar_prefetch = 0 : i64, scratch_operands = 0 : i64, tpu.core_type = #tpu.core_type<tc>, window_params = [{transform_indices = @transform_0, window_bounds = array<i64: 1, 16, 16>}, {transform_indices = @transform_1, window_bounds = array<i64: 1, 16, 16>}, {transform_indices = @transform_2, window_bounds = array<i64: 1, 1, 14>}]} {
    %c0 = arith.constant 0 : index
    %c0_0 = arith.constant 0 : index
    %c0_1 = arith.constant 0 : index
    %0 = vector.load %arg1[%c0, %c0_0, %c0_1] : memref<1x16x16xf32, #tpu.memory_space<vmem>>, vector<1x16x16xf32>
    %c0_2 = arith.constant 0 : index
    %c0_3 = arith.constant 0 : index
    %c0_4 = arith.constant 0 : index
    %1 = vector.load %arg2[%c0_2, %c0_3, %c0_4] : memref<1x16x16xf32, #tpu.memory_space<vmem>>, vector<1x16x16xf32>
    %2 = arith.subf %0, %1 : vector<1x16x16xf32>
    %3 = vector.extract_strided_slice %2 {offsets = [0, 0, 0], sizes = [1, 14, 16], strides = [1, 1, 1]} : vector<1x16x16xf32> to vector<1x14x16xf32>
    %4 = vector.extract_strided_slice %2 {offsets = [0, 1, 0], sizes = [1, 14, 16], strides = [1, 1, 1]} : vector<1x16x16xf32> to vector<1x14x16xf32>
    %5 = vector.extract_strided_slice %2 {offsets = [0, 2, 0], sizes = [1, 14, 16], strides = [1, 1, 1]} : vector<1x16x16xf32> to vector<1x14x16xf32>
    %cst = arith.constant 2.000000e+00 : f32
    %6 = vector.broadcast %cst : f32 to vector<1x14x16xf32>
    %7 = arith.mulf %6, %4 : vector<1x14x16xf32>
    %8 = arith.addf %3, %7 : vector<1x14x16xf32>
    %9 = arith.addf %8, %5 : vector<1x14x16xf32>
    %10 = arith.subf %3, %5 : vector<1x14x16xf32>
    %11 = vector.extract_strided_slice %9 {offsets = [0, 0, 0], sizes = [1, 14, 14], strides = [1, 1, 1]} : vector<1x14x16xf32> to vector<1x14x14xf32>
    %12 = vector.extract_strided_slice %9 {offsets = [0, 0, 2], sizes = [1, 14, 14], strides = [1, 1, 1]} : vector<1x14x16xf32> to vector<1x14x14xf32>
    %13 = arith.subf %11, %12 : vector<1x14x14xf32>
    %14 = vector.extract_strided_slice %10 {offsets = [0, 0, 0], sizes = [1, 14, 14], strides = [1, 1, 1]} : vector<1x14x16xf32> to vector<1x14x14xf32>
    %15 = vector.extract_strided_slice %10 {offsets = [0, 0, 1], sizes = [1, 14, 14], strides = [1, 1, 1]} : vector<1x14x16xf32> to vector<1x14x14xf32>
    %cst_5 = arith.constant 2.000000e+00 : f32
    %16 = vector.broadcast %cst_5 : f32 to vector<1x14x14xf32>
    %17 = arith.mulf %16, %15 : vector<1x14x14xf32>
    %18 = arith.addf %14, %17 : vector<1x14x14xf32>
    %19 = vector.extract_strided_slice %10 {offsets = [0, 0, 2], sizes = [1, 14, 14], strides = [1, 1, 1]} : vector<1x14x16xf32> to vector<1x14x14xf32>
    %20 = arith.addf %18, %19 : vector<1x14x14xf32>
    %21 = math.absf %13 : vector<1x14x14xf32>
    %22 = math.absf %20 : vector<1x14x14xf32>
    %23 = arith.addf %21, %22 : vector<1x14x14xf32>
    %cst_6 = arith.constant dense<0.000000e+00> : vector<14x14xf32>
    %24 = vector.multi_reduction <add>, %23, %cst_6 [0] : vector<1x14x14xf32> to vector<14x14xf32>
    %25 = vector.shape_cast %24 : vector<14x14xf32> to vector<1x14x14xf32>
    %cst_7 = arith.constant dense<0.000000e+00> : vector<1x14xf32>
    %26 = vector.multi_reduction <add>, %25, %cst_7 [1] : vector<1x14x14xf32> to vector<1x14xf32>
    %27 = vector.shape_cast %26 : vector<1x14xf32> to vector<1x1x14xf32>
    %c0_8 = arith.constant 0 : index
    %c0_9 = arith.constant 0 : index
    %c0_10 = arith.constant 0 : index
    %28 = vector.load %arg3[%c0_8, %c0_9, %c0_10] : memref<1x1x14xf32, #tpu.memory_space<vmem>>, vector<1x1x14xf32>
    tpu.vector_store %arg3[%c0_8, %c0_9, %c0_10], %27 {strides = array<i32>} : memref<1x1x14xf32, #tpu.memory_space<vmem>>, vector<1x1x14xf32>,
    return
  }
  func.func @transform_0(%arg0: i32) -> (i32, i32, i32) {
    %c0_i32 = arith.constant 0 : i32
    %c0_i32_0 = arith.constant 0 : i32
    %c0_i32_1 = arith.constant 0 : i32
    return %arg0, %c0_i32, %c0_i32_0 : i32, i32, i32
  }
  func.func @transform_1(%arg0: i32) -> (i32, i32, i32) {
    %c0_i32 = arith.constant 0 : i32
    %c0_i32_0 = arith.constant 0 : i32
    %c0_i32_1 = arith.constant 0 : i32
    return %arg0, %c0_i32, %c0_i32_0 : i32, i32, i32
  }
  func.func @transform_2(%arg0: i32) -> (i32, i32, i32) {
    %c0_i32 = arith.constant 0 : i32
    %c0_i32_0 = arith.constant 0 : i32
    %c0_i32_1 = arith.constant 0 : i32
    return %arg0, %c0_i32, %c0_i32_0 : i32, i32, i32
  }
}

</mosaic_0001>

<llo_original>
// kernel: tpu_custom_call.1
$region0: #{tpu_custom_call.1}
  #allocation0 [shape = 'u32[]', space=smem, size = 0x4, offset = 0x4, fixed_abs, tag = 'smem constant byte address 0x4 - core index']
  #allocation1 [shape = 'u32[144,128]{1,0:T(1,128)}', space=vmem, size = 0x12000, scoped, tag = 'internal scratch']
  %s0 = inlined_call_operand.hbm [shape: f32[2,16,16], index: 0, kind: input, shape index: {}]
  %s1 = inlined_call_operand.hbm [shape: f32[2,16,16], index: 1, kind: input, shape index: {}]
  %s2 = inlined_call_operand.hbm [shape: f32[2,1,14], index: 2, kind: output, shape index: {}]
  %s3 = sld [smem:[#allocation0]]
  $region49: #{tpu_custom_call.1} parent=0
    _
  %s5 = ssub.s32 1, %s3
  %s6 = scalar_select 0, %s5, %s3
  $region1: #{tpu_custom_call.1} parent=0
    #allocation2 [shape = 'u8[16384]{0}', space=vmem, size = 0x4000, scoped, tag = 'input window, operand 0']
    #allocation3 [shape = 's32[2]{0}', space=sflag, size = 0x8, scoped, tag = 'scoped memory for tpu_custom_call.1']
    #allocation4 [shape = 's32[2]{0}', space=sflag, size = 0x8, scoped, tag = 'scoped memory for tpu_custom_call.1']
    #allocation5 [shape = 'u8[16384]{0}', space=vmem, size = 0x4000, scoped, tag = 'input window, operand 1']
    #allocation6 [shape = 's32[2]{0}', space=sflag, size = 0x8, scoped, tag = 'scoped memory for tpu_custom_call.1']
    #allocation7 [shape = 'u8[1024]{0}', space=vmem, size = 0x400, scoped, tag = 'output window, operand 0']
    %7 = vsyncpa [#allocation3], 0
    %s8 = scalar_lea.sflag [#allocation3], 1
    %9 = vsyncpa %s8, 0
    %10 = vsyncpa [#allocation6], 0
    %s11 = scalar_lea.sflag [#allocation6], 1
    %12 = vsyncpa %s11, 0
    %13 = vsyncpa [#allocation4], 0
    %s14 = scalar_lea.sflag [#allocation4], 1
    %15 = vsyncpa %s14, 0
    loop: start=0, step=1, limit=4
    $region2: #{tpu_custom_call.1} parent=1 // loop_pre_header
      _
    $region3: #{tpu_custom_call.1} parent=1 // loop_header
      %s17 = sphi 0, %s21
      %p18 = scmp.ge.s32.totalorder %s17, 4
      %s27 = sphi 0, %s29
      %s30 = sphi 0, %s27
      %s31 = sphi 0, %s30
      %s47 = sphi 0, %s31
      %s53 = sphi 0, %s55
      %s56 = sphi 0, %s53
      %s57 = sphi 0, %s56
      %s73 = sphi 0, %s57
      %s79 = sphi 0, %s81
      %s82 = sphi 0, %s79
      %s83 = sphi 0, %s82
      %s99 = sphi 0, %s83
    $region4: #{tpu_custom_call.1} parent=1 // loop_header_branch
      %20 = sbr.rel (%p18) target = $region8
    $region5: #{tpu_custom_call.1} parent=1 // loop_body
      %s22 = ssub.s32 %s17, 1
      %s23 = ssub.s32 %s17, 2
      %s24 = sadd.s32 %s17, 1
      %s25 = ssub.s32 %s17, %s24
      %p26 = scmp.eq.s32.totalorder %s25, 0
      %s28 = sadd.s32 %s27, 1
      %s29 = scalar_select %p26, %s27, %s28
      %p32 = pneg %p26
      %p33 = scmp.eq.s32.totalorder %s17, 1
      %p34 = por %p32, %p33
      %p35 = scmp.ne.s32.totalorder %s27, %s30
      %p36 = scmp.eq.s32.totalorder %s17, 0
      %p37 = por %p35, %p36
      %p38 = scmp.ne.s32.totalorder %s27, %s30
      %p39 = scmp.eq.s32.totalorder %s22, 1
      %p40 = por %p38, %p39
      %p41 = scmp.ne.s32.totalorder %s30, %s31
      %p42 = scmp.eq.s32.totalorder %s22, 0
      %p43 = por %p41, %p42
      %p44 = scmp.ne.s32.totalorder %s30, %s31
      %p45 = scmp.eq.s32.totalorder %s23, 1
      %p46 = por %p44, %p45
      %p48 = scmp.ne.s32.totalorder %s31, %s47
      %p49 = scmp.eq.s32.totalorder %s23, 0
      %p50 = por %p48, %p49
      %s51 = ssub.s32 %s17, %s24
      %p52 = scmp.eq.s32.totalorder %s51, 0
      %s54 = sadd.s32 %s53, 1
      %s55 = scalar_select %p52, %s53, %s54
      %p58 = pneg %p52
      %p59 = scmp.eq.s32.totalorder %s17, 1
      %p60 = por %p58, %p59
      %p61 = scmp.ne.s32.totalorder %s53, %s56
      %p62 = scmp.eq.s32.totalorder %s17, 0
      %p63 = por %p61, %p62
      %p64 = scmp.ne.s32.totalorder %s53, %s56
      %p65 = scmp.eq.s32.totalorder %s22, 1
      %p66 = por %p64, %p65
      %p67 = scmp.ne.s32.totalorder %s56, %s57
      %p68 = scmp.eq.s32.totalorder %s22, 0
      %p69 = por %p67, %p68
      %p70 = scmp.ne.s32.totalorder %s56, %s57
      %p71 = scmp.eq.s32.totalorder %s23, 1
      %p72 = por %p70, %p71
      %p74 = scmp.ne.s32.totalorder %s57, %s73
      %p75 = scmp.eq.s32.totalorder %s23, 0
      %p76 = por %p74, %p75
      %s77 = ssub.s32 %s17, %s24
      %p78 = scmp.eq.s32.totalorder %s77, 0
      %s80 = sadd.s32 %s79, 1
      %s81 = scalar_select %p78, %s79, %s80
      %p84 = pneg %p78
      %p85 = scmp.eq.s32.totalorder %s17, 1
      %p86 = por %p84, %p85
      %p87 = scmp.ne.s32.totalorder %s79, %s82
      %p88 = scmp.eq.s32.totalorder %s17, 0
      %p89 = por %p87, %p88
      %p90 = scmp.ne.s32.totalorder %s79, %s82
      %p91 = scmp.eq.s32.totalorder %s22, 1
      %p92 = por %p90, %p91
      %p93 = scmp.ne.s32.totalorder %s82, %s83
      %p94 = scmp.eq.s32.totalorder %s22, 0
      %p95 = por %p93, %p94
      %p96 = scmp.ne.s32.totalorder %s82, %s83
      %p97 = scmp.eq.s32.totalorder %s23, 1
      %p98 = por %p96, %p97
      %p100 = scmp.ne.s32.totalorder %s83, %s99
      %p101 = scmp.eq.s32.totalorder %s23, 0
      %p102 = por %p100, %p101
      %p103 = scmp.le.s32.totalorder 1, %s17
      %p104 = scmp.lt.s32.totalorder %s17, 3
      %p105 = pnand %p103, %p104
      %p106 = pneg %p105
      // Predicated region
      $region9: #{tpu_custom_call.1} parent=5 // pred_check
        _
      $region10: #{tpu_custom_call.1} parent=5 // pred_check_branch
        %108 = sbr.rel (%p105) target = $region12
      $region11: #{tpu_custom_call.1} parent=5 // pred_region
        %s109 = ssub.s32 %s17, 1
      $region12: #{tpu_custom_call.1} parent=5 // pred_fallthru
        _
      %p110 = scmp.lt.s32.totalorder %s17, 2
      // Predicated region
      $region13: #{tpu_custom_call.1} parent=5 // pred_check
        %p111 = pneg %p110
      $region14: #{tpu_custom_call.1} parent=5 // pred_check_branch
        %113 = sbr.rel (%p111) target = $region16
      $region15: #{tpu_custom_call.1} parent=5 // pred_region
        // Predicated region
        $region17: #{tpu_custom_call.1} parent=15 // pred_check
          %p114 = pneg %p37
        $region18: #{tpu_custom_call.1} parent=15 // pred_check_branch
          %116 = sbr.rel (%p114) target = $region20
        $region19: #{tpu_custom_call.1} parent=15 // pred_region
          %s117 = sand.u32 %s27, 1
          %s118 = scalar_lea.sflag [#allocation3], %s117
          %s119 = sand.u32 %s27, 1
          %s120 = smul.addr %s119, 16
          %s121 = scalar_lea.vmem [#allocation2], %s120
          %s123 = ssub.s32 256, 256
          %124 = vsyncadd %s118, %s123
          %s125 = smul.addr %s17, 2
          %s126 = smul.addr %s125, 128
          %s127 = scalar_lea.hbm %s0, %s126
          %s128 = sshll.u32 %s121, 4
          %s129 = int_to_ptr.vmem [resolvable:$true] %s128
          %134 = dma.hbm_to_vmem [thread:$0]  %s127, 256, %s129, %s118, 128, 128, 8
        $region20: #{tpu_custom_call.1} parent=15 // pred_fallthru
          _
        // Predicated region
        $region21: #{tpu_custom_call.1} parent=15 // pred_check
          %p135 = pneg %p63
        $region22: #{tpu_custom_call.1} parent=15 // pred_check_branch
          %137 = sbr.rel (%p135) target = $region24
        $region23: #{tpu_custom_call.1} parent=15 // pred_region
          %s138 = sand.u32 %s53, 1
          %s139 = scalar_lea.sflag [#allocation6], %s138
          %s140 = sand.u32 %s53, 1
          %s141 = smul.addr %s140, 16
          %s142 = scalar_lea.vmem [#allocation5], %s141
          %s144 = ssub.s32 256, 256
          %145 = vsyncadd %s139, %s144
          %s146 = smul.addr %s17, 2
          %s147 = smul.addr %s146, 128
          %s148 = scalar_lea.hbm %s1, %s147
          %s149 = sshll.u32 %s142, 4
          %s150 = int_to_ptr.vmem [resolvable:$true] %s149
          %155 = dma.hbm_to_vmem [thread:$0]  %s148, 256, %s150, %s139, 128, 128, 8
        $region24: #{tpu_custom_call.1} parent=15 // pred_fallthru
          _
      $region16: #{tpu_custom_call.1} parent=5 // pred_fallthru
        _
      %p156 = scmp.le.s32.totalorder 1, %s17
      %p157 = scmp.lt.s32.totalorder %s17, 3
      %p158 = pnand %p156, %p157
      %p159 = pneg %p158
      // Predicated region
      $region25: #{tpu_custom_call.1} parent=5 // pred_check
        _
      $region26: #{tpu_custom_call.1} parent=5 // pred_check_branch
        %161 = sbr.rel (%p158) target = $region28
      $region27: #{tpu_custom_call.1} parent=5 // pred_region
        %s162 = ssub.s32 %s17, 1
        %s163 = sand.u32 %s30, 1
        %s164 = scalar_lea.sflag [#allocation3], %s163
        %s165 = sand.u32 %s30, 1
        %s166 = smul.addr %s165, 16
        %s167 = scalar_lea.vmem [#allocation2], %s166
        // Predicated region
        $region29: #{tpu_custom_call.1} parent=27 // pred_check
          %p168 = pneg %p43
        $region30: #{tpu_custom_call.1} parent=27 // pred_check_branch
          %170 = sbr.rel (%p168) target = $region32
        $region31: #{tpu_custom_call.1} parent=27 // pred_region
          %171 = dma.done %s164, 256
        $region32: #{tpu_custom_call.1} parent=27 // pred_fallthru
          _
        %s172 = sand.u32 %s56, 1
        %s173 = scalar_lea.sflag [#allocation6], %s172
        %s174 = sand.u32 %s56, 1
        %s175 = smul.addr %s174, 16
        %s176 = scalar_lea.vmem [#allocation5], %s175
        // Predicated region
        $region33: #{tpu_custom_call.1} parent=27 // pred_check
          %p177 = pneg %p69
        $region34: #{tpu_custom_call.1} parent=27 // pred_check_branch
          %179 = sbr.rel (%p177) target = $region36
        $region35: #{tpu_custom_call.1} parent=27 // pred_region
          %180 = dma.done %s173, 256
        $region36: #{tpu_custom_call.1} parent=27 // pred_fallthru
          _
        %s181 = sand.u32 %s30, 1
        %s182 = scalar_lea.sflag [#allocation3], %s181
        %s183 = sand.u32 %s30, 1
        %s184 = smul.addr %s183, 16
        %s185 = scalar_lea.vmem [#allocation2], %s184
        %p186 = pneg %p43
        %p187 = pneg %p40
        %s188 = sand.u32 %s56, 1
        %s189 = scalar_lea.sflag [#allocation6], %s188
        %s190 = sand.u32 %s56, 1
        %s191 = smul.addr %s190, 16
        %s192 = scalar_lea.vmem [#allocation5], %s191
        %p193 = pneg %p69
        %p194 = pneg %p66
        %p195 = pneg %p95
        %p196 = pneg %p92
        %s197 = sand.u32 %s82, 1
        %s198 = scalar_lea.sflag [#allocation4], %s197
        %s199 = sand.u32 %s82, 1
        %s200 = scalar_lea.vmem [#allocation7], %s199
        %v201 = vld [vmem:[%s167] sm:$0xff]
        %v202 = vld [vmem:[%s167 + $0x8] sm:$0xff]
        %v203 = vld [vmem:[%s176] sm:$0xff]
        %v204 = vld [vmem:[%s176 + $0x8] sm:$0xff]
        %v205 = vsub.f32 %v201, %v203
        %v206 = vsub.f32 %v202, %v204
        %v207 = vmul.f32 %v205, 2.0
        %v208 = vmul.f32 %v206, 2.0
        %vm211 = vcmask 1046528
        %v212 = vrot.slane %v207, 1
        %v213 = vrot.slane %v208, 1
        %v214 = vsel %vm211, %v212, %v213
        %v217 = vadd.f32 %v205, %v214
        %v218 = vadd.f32 %v206, %v213
        %vm221 = vcmask 1045504
        %v222 = vrot.slane %v205, 2
        %v223 = vrot.slane %v206, 2
        %v224 = vsel %vm221, %v222, %v223
        %v227 = vadd.f32 %v217, %v224
        %v228 = vadd.f32 %v218, %v223
        %v229 = vsub.f32 %v205, %v224
        %v230 = vsub.f32 %v206, %v223
        %233 = vrot.lane.b32.xlu0 %v227, 126
        %v234 = vpop.permute.xlu0 %233
        %235 = vrot.lane.b32.xlu0 %v228, 126
        %v236 = vpop.permute.xlu0 %235
        %v239 = vsub.f32 %v227, %v234
        %v240 = vsub.f32 %v228, %v236
        %v241 = vmul.f32 %v229, 2.0
        %v242 = vmul.f32 %v230, 2.0
        %245 = vrot.lane.b32.xlu0 %v241, 127
        %v246 = vpop.permute.xlu0 %245
        %247 = vrot.lane.b32.xlu0 %v242, 127
        %v248 = vpop.permute.xlu0 %247
        %v251 = vadd.f32 %v229, %v246
        %v252 = vadd.f32 %v230, %v248
        %255 = vrot.lane.b32.xlu0 %v229, 126
        %v256 = vpop.permute.xlu0 %255
        %257 = vrot.lane.b32.xlu0 %v230, 126
        %v258 = vpop.permute.xlu0 %257
        %v261 = vadd.f32 %v251, %v256
        %v262 = vadd.f32 %v252, %v258
        %v263 = vand.u32 2147483647, %v239
        %v264 = vand.u32 2147483647, %v240
        %v265 = vand.u32 2147483647, %v261
        %v266 = vand.u32 2147483647, %v262
        %v267 = vadd.f32 %v263, %v265
        %v268 = vadd.f32 %v264, %v266
        %v269 = vadd.f32 %v267, 0.0
        %v270 = vadd.f32 %v268, 0.0
        %vm271 = vcmask 113664
        %v272 = vsel %vm271, %v269, 0.0
        %vm273 = vcmask 111616
        %v274 = vsel %vm273, %v270, 0.0
        %v275 = vadd.f32 %v272, %v274
        %v276 = vrot.slane %v275, 4
        %v277 = vadd.f32 %v275, %v276
        %v278 = vrot.slane %v277, 2
        %v279 = vadd.f32 %v277, %v278
        %v280 = vrot.slane %v279, 1
        %v281 = vadd.f32 %v279, %v280
        %vm282 = vcmask 106496
        %283 = vst.msk [vmem:[%s200] sm:$0x1] %vm282, %v281
        %s284 = sand.u32 %s82, 1
        %s285 = scalar_lea.sflag [#allocation4], %s284
        %s286 = sand.u32 %s82, 1
        %s287 = scalar_lea.vmem [#allocation7], %s286
        // Predicated region
        $region37: #{tpu_custom_call.1} parent=27 // pred_check
          %p288 = pneg %p92
        $region38: #{tpu_custom_call.1} parent=27 // pred_check_branch
          %290 = sbr.rel (%p288) target = $region40
        $region39: #{tpu_custom_call.1} parent=27 // pred_region
          %s292 = ssub.s32 16, 16
          %293 = vsyncadd %s285, %s292
          %s294 = smul.addr %s22, 16
          %s295 = scalar_lea.hbm %s2, %s294
          %s297 = sshll.u32 %s287, 4
          %s298 = int_to_ptr.vmem [resolvable:$true] %s297
          %300 = dma.vmem_to_hbm [thread:$0]  %s298, 16, %s295, %s285
        $region40: #{tpu_custom_call.1} parent=27 // pred_fallthru
          _
      $region28: #{tpu_custom_call.1} parent=5 // pred_fallthru
        _
      %p301 = scmp.le.s32.totalorder 2, %s17
      // Predicated region
      $region41: #{tpu_custom_call.1} parent=5 // pred_check
        %p302 = pneg %p301
      $region42: #{tpu_custom_call.1} parent=5 // pred_check_branch
        %304 = sbr.rel (%p302) target = $region44
      $region43: #{tpu_custom_call.1} parent=5 // pred_region
        %s305 = ssub.s32 %s17, 2
        // Predicated region
        $region45: #{tpu_custom_call.1} parent=43 // pred_check
          %p306 = pneg %p98
        $region46: #{tpu_custom_call.1} parent=43 // pred_check_branch
          %308 = sbr.rel (%p306) target = $region48
        $region47: #{tpu_custom_call.1} parent=43 // pred_region
          %s309 = sand.u32 %s83, 1
          %s310 = scalar_lea.sflag [#allocation4], %s309
          %s311 = sand.u32 %s83, 1
          %s312 = scalar_lea.vmem [#allocation7], %s311
          %313 = dma.done %s310, 16
        $region48: #{tpu_custom_call.1} parent=43 // pred_fallthru
          _
      $region44: #{tpu_custom_call.1} parent=5 // pred_fallthru
        _
    $region6: #{tpu_custom_call.1} parent=1 // loop_footer
      %s21 = sadd.s32 1, %s17
    $region7: #{tpu_custom_call.1} parent=1 // loop_footer_branch
      %16 = sbr.rel target = $region3
    $region8: #{tpu_custom_call.1} parent=1 // loop_exit
      _
    %314 = vsyncpa [#allocation3], 1
    %s315 = scalar_lea.sflag [#allocation3], 1
    %316 = vsyncpa %s315, 1
    %317 = vsyncpa [#allocation6], 1
    %s318 = scalar_lea.sflag [#allocation6], 1
    %319 = vsyncpa %s318, 1
    %320 = vsyncpa [#allocation4], 1
    %s321 = scalar_lea.sflag [#allocation4], 1
    %322 = vsyncpa %s321, 1

</llo_original>
